<compile_context>
chip_gen: v6e
topology: v6e:2x2x1
jax: 0.10.0
libtpu: 0.0.40
codegen_flags: <defaults>
</compile_context>

<pallas_src>
import functools

import jax
import jax.numpy as jnp
from jax.experimental import pallas as pl
from jax.experimental.pallas import tpu as pltpu

K_SLOTS = 4
HID = 32               # slot / latent width
DEC_HID = 64           # per-branch decoder hidden width (surface | air -> 128 packed)
OUT_W = 128            # lane-dense packed decoder output width
DEC_MAX_TILE = 512     # points per decoder grid step (rows per step = K * tile)
DEC_DTYPE = jnp.bfloat16   # decoder matmul-input dtype (f32 accumulate)


def _round_up(x, m):
    return ((x + m - 1) // m) * m


def _sigmoid(x):
    return 1.0 / (1.0 + jnp.exp(-x))


def _softplus(x):
    # numerically-stable softplus using only exp/log/abs/max
    return jnp.maximum(x, 0.0) + jnp.log(1.0 + jnp.exp(-jnp.abs(x)))


# ----------------------------------------------------------------------------
# Kernel 1 (fused slot update): q-path GRU+MLP+head, rsample, optional p-path
# GRU+MLP+head, and KL(q||p) — one launch, one lane-dense [B*K, 128] output:
#   cols  0: 32  q_h_new
#   cols 32: 64  p_h_new      (zeros on the first step)
#   cols 64: 96  z_what       (= q_mu + q_std * eps)
#   cols 96:128  KL per slot  (value broadcast over the 32 lanes)
# ----------------------------------------------------------------------------
def _gru_head(x, h, w_refs):
    wih, whh, bih, bhh, w1, b1, w2, b2 = w_refs
    gi = jnp.dot(x, wih[...], preferred_element_type=jnp.float32) + bih[...]
    gh = jnp.dot(h, whh[...], preferred_element_type=jnp.float32) + bhh[...]
    # sigmoid over the (r, z) gates in one 64-lane op before slicing
    rz = _sigmoid(gi[:, :2 * HID] + gh[:, :2 * HID])
    r, u = rz[:, :HID], rz[:, HID:]
    n = jnp.tanh(gi[:, 2 * HID:] + r * gh[:, 2 * HID:])
    h_new = (1.0 - u) * n + u * h
    # MLP(32, 32, 64): Linear -> ReLU -> Linear; head: (mu, softplus(raw_std))
    hid = jnp.maximum(
        jnp.dot(h_new, w1[...], preferred_element_type=jnp.float32) + b1[...], 0.0)
    o = jnp.dot(hid, w2[...], preferred_element_type=jnp.float32) + b2[...]
    return h_new, o[:, :HID], _softplus(o[:, HID:])


def slot_kernel(use_prior, *refs):
    if use_prior:
        (x_ref, qh_ref, eps_ref, zprev_ref, ph_ref, *w, out_ref) = refs
        q_w, p_w = w[:8], w[8:]
    else:
        (x_ref, qh_ref, eps_ref, *q_w, out_ref) = refs
        p_w = None

    q_h_new, q_mu, q_std = _gru_head(x_ref[...], qh_ref[...], q_w)
    z = q_mu + q_std * eps_ref[...]                       # rsample folded in-kernel

    if use_prior:
        p_h_new, p_mu, p_std = _gru_head(zprev_ref[...], ph_ref[...], p_w)
        # KL(N(q_mu,q_std) || N(p_mu,p_std)); logs computed directly for stability
        kl_el = (jnp.log(p_std) - jnp.log(q_std)
                 + (q_std * q_std + (q_mu - p_mu) ** 2) / (2.0 * p_std * p_std)
                 - 0.5)
    else:
        # prior is N(0, 1)
        p_h_new = jnp.zeros_like(q_h_new)
        kl_el = -jnp.log(q_std) + 0.5 * (q_std * q_std + q_mu * q_mu) - 0.5

    kl = jnp.sum(kl_el, axis=-1, keepdims=True)           # [BK, 1]
    out_ref[...] = jnp.concatenate(
        [q_h_new, p_h_new, z, jnp.broadcast_to(kl, z.shape)], axis=-1)


@functools.partial(jax.jit, static_argnames=("use_prior",))
def slot_update(slots, q_h, eps, z_prev, p_h, q_params, p_params, *, use_prior):
    BK = slots.shape[0]
    if use_prior:
        args = (slots, q_h, eps, z_prev, p_h) + tuple(q_params) + tuple(p_params)
    else:
        args = (slots, q_h, eps) + tuple(q_params)
    in_specs = [pl.BlockSpec(a.shape, lambda i: (0, 0)) for a in args]
    out = pl.pallas_call(
        functools.partial(slot_kernel, use_prior),
        grid=(1,),
        in_specs=in_specs,
        out_specs=pl.BlockSpec((BK, 4 * HID), lambda i: (0, 0)),
        out_shape=jax.ShapeDtypeStruct((BK, 4 * HID), jnp.float32),
        compiler_params=pltpu.CompilerParams(dimension_semantics=("arbitrary",)),
    )(*args)
    q_h_new = out[:, :HID]
    p_h_new = out[:, HID:2 * HID]
    z = out[:, 2 * HID:3 * HID]
    kl_slot = out[:, 3 * HID]                              # [BK]
    return q_h_new, p_h_new, z, kl_slot


# ----------------------------------------------------------------------------
# Kernel 2 (decoder): grid = (B, N_tiles).  Per step: build features in VMEM,
# project geometry once (shared across K slots), add per-slot latent projection,
# and write one lane-dense [K, tile, 128] packed output block.
# ----------------------------------------------------------------------------
def decoder_kernel(pts_ref, z_ref, wg_ref, wz_ref, w2_ref, b1_ref, b2_ref, out_ref):
    pts = pts_ref[0]                                      # [tile, 9]  f32
    z = z_ref[0]                                          # [K, 32]    f32
    tile = pts.shape[0]
    k_slots = z.shape[0]

    geo = jnp.dot(pts.astype(wg_ref.dtype), wg_ref[...],
                  preferred_element_type=jnp.float32)                   # [tile, 128]
    zproj = jnp.dot(z.astype(wz_ref.dtype), wz_ref[...],
                    preferred_element_type=jnp.float32) + b1_ref[...]   # [K, 128]

    lane = jax.lax.broadcasted_iota(jnp.int32, (tile, OUT_W), 1)
    for k in range(k_slots):                              # static unroll (K = 4)
        hid = jnp.maximum(geo + zproj[k:k + 1, :], 0.0)   # [tile, 128]
        o = jnp.dot(hid.astype(w2_ref.dtype), w2_ref[...],
                    preferred_element_type=jnp.float32) + b2_ref[...]   # [tile, 128]
        o = jnp.where(lane < 3, _sigmoid(o), o)           # sigmoid on rgb lanes only
        out_ref[0, k, :, :] = o


@jax.jit
def decoder_forward(pts, z_flat, dec):
    # pts: [B, N, 9] = [p_surface | p_air | ray] ; z_flat: [B*K, 32]
    B, N, _ = pts.shape
    K = z_flat.shape[0] // B
    tile = min(DEC_MAX_TILE, _round_up(N, 8))
    n_pad = _round_up(N, tile)
    if n_pad != N:
        pts = jnp.pad(pts, ((0, 0), (0, n_pad - N), (0, 0)))
    z3 = z_flat.reshape(B, K, HID)

    out = pl.pallas_call(
        decoder_kernel,
        grid=(B, n_pad // tile),
        in_specs=[
            pl.BlockSpec((1, tile, 9), lambda b, j: (b, j, 0)),
            pl.BlockSpec((1, K, HID), lambda b, j: (b, 0, 0)),
            pl.BlockSpec(dec["wg"].shape, lambda b, j: (0, 0)),
            pl.BlockSpec(dec["wz"].shape, lambda b, j: (0, 0)),
            pl.BlockSpec(dec["w2"].shape, lambda b, j: (0, 0)),
            pl.BlockSpec(dec["b1"].shape, lambda b, j: (0, 0)),
            pl.BlockSpec(dec["b2"].shape, lambda b, j: (0, 0)),
        ],
        out_specs=pl.BlockSpec((1, K, tile, OUT_W), lambda b, j: (b, 0, j, 0)),
        out_shape=jax.ShapeDtypeStruct((B, K, n_pad, OUT_W), jnp.float32),
        compiler_params=pltpu.CompilerParams(
            dimension_semantics=("parallel", "parallel")),
    )(pts, z3, dec["wg"], dec["wz"], dec["w2"], dec["b1"], dec["b2"])

    out = out[:, :, :N, :]
    return out[..., 0:3], out[..., 3:4], out[..., 4:5]    # rgb, logit_s, logit_a


# ----------------------------------------------------------------------------
# ObjectModule wrapper (history bookkeeping is plain-Python glue, as in torch)
# ----------------------------------------------------------------------------
class ObjectModuleJAX:
    def __init__(self, key):
        self.K = K_SLOTS
        ks = iter(jax.random.split(key, 32))

        def w(shape, scale=0.1):
            return (scale * jax.random.normal(next(ks), shape)).astype(jnp.float32)

        def zeros(shape):
            return jnp.zeros(shape, jnp.float32)

        def make_gru_mlp():
            # GRU weights pre-transposed [in, 3*hid], gate order (r, z, n);
            # then MLP(32,32,64) whose 64-wide output is (mu, raw_std).
            return (w((HID, 3 * HID)), w((HID, 3 * HID)),
                    zeros((1, 3 * HID)), zeros((1, 3 * HID)),
                    w((HID, HID)), zeros((1, HID)),
                    w((HID, 2 * HID)), zeros((1, 2 * HID)))

        self.q_params = make_gru_mlp()
        self.p_params = make_gru_mlp()

        # synthetic NeRF-style decoder, packed for the fused kernel:
        #   surface branch: [p_surface(3), ray(3), z(32)] -> 64 -> (rgb 3, logit 1)
        #   air branch    : [p_air(3), z(32)]             -> 64 -> (logit 1)
        w1s = w((3 + 3 + HID, DEC_HID))                   # [38, 64]
        w1a = w((3 + HID, DEC_HID))                       # [35, 64]
        wrgb, wls, wla = w((DEC_HID, 3)), w((DEC_HID, 1)), w((DEC_HID, 1))

        # geometry projection (pts layout = [p_surface | p_air | ray])
        wg = jnp.zeros((9, 2 * DEC_HID), jnp.float32)
        wg = wg.at[0:3, :DEC_HID].set(w1s[0:3])           # p_surface -> surface hid
        wg = wg.at[6:9, :DEC_HID].set(w1s[3:6])           # ray       -> surface hid
        wg = wg.at[3:6, DEC_HID:].set(w1a[0:3])           # p_air     -> air hid
        # latent projection (surface cols 0:64, air cols 64:128)
        wz = jnp.concatenate([w1s[6:], w1a[3:]], axis=1)  # [32, 128]
        # packed second layer: cols 0:3 rgb, col 3 logit_surface, col 4 logit_air
        w2 = jnp.zeros((2 * DEC_HID, OUT_W), jnp.float32)
        w2 = w2.at[:DEC_HID, 0:3].set(wrgb)
        w2 = w2.at[:DEC_HID, 3:4].set(wls)
        w2 = w2.at[DEC_HID:, 4:5].set(wla)
        self.dec = dict(
            wg=wg.astype(DEC_DTYPE), wz=wz.astype(DEC_DTYPE), w2=w2.astype(DEC_DTYPE),
            b1=zeros((1, 2 * DEC_HID)), b2=zeros((1, OUT_W)))

        self.q_h_what_his = []
        self.p_h_what_his = []
        self.z_what_his = []

    def init_his(self, B):
        self.q_h_what_his.append(jnp.zeros((B * self.K, HID), jnp.float32))
        self.p_h_what_his.append(jnp.zeros((B * self.K, HID), jnp.float32))

    def free_his(self):
        self.q_h_what_his, self.p_h_what_his, self.z_what_his = [], [], []

    def forward(self, p_eval_surface, p_eval_air, ray, slots, key):
        B, N, _ = p_eval_surface.shape
        K = self.K

        # ---- fused slot update: q-GRU+head, rsample, (prior GRU+head), KL ----
        # use_prior (pre-append) == NOT (len(z_what_his) == 1 post-append) in torch
        use_prior = len(self.z_what_his) > 0
        q_h = self.q_h_what_his[-1]
        eps = jax.random.normal(key, (B * K, HID), jnp.float32)
        z_prev = self.z_what_his[-1].reshape(-1, HID) if use_prior else None
        p_h = self.p_h_what_his[-1] if use_prior else None

        q_h_new, p_h_new, z_flat, kl_slot = slot_update(
            slots.reshape(-1, HID).astype(jnp.float32), q_h, eps, z_prev, p_h,
            self.q_params, self.p_params, use_prior=use_prior)

        self.q_h_what_his.append(q_h_new)
        if use_prior:
            # note: the torch module also only appends p_h on steps >= 2
            self.p_h_what_his.append(p_h_new)
        z_what = z_flat.reshape(B, K, HID)
        self.z_what_his.append(z_what)
        kl_what = kl_slot.reshape(B, K).sum(axis=1)        # [B]

        # ---- decoder: features built in-kernel, outputs packed lane-dense ----
        pts = jnp.concatenate(
            [p_eval_surface, p_eval_air, ray], axis=-1).astype(jnp.float32)
        rgb, logits_surface, logits_air = decoder_forward(pts, z_flat, self.dec)

        return dict(rgb=rgb, logits_surface=logits_surface,
                    logits_air=logits_air, z_what=z_what, kl_what=kl_what)


if __name__ == "__main__":
    key = jax.random.PRNGKey(0)
    k_ps, k_pa, k_ray, k_slots, k_params, k_eps1, k_eps2 = jax.random.split(key, 7)

    B, N = 2, 64
    p_eval_surface = jax.random.normal(k_ps, (B, N, 3), jnp.float32)
    p_eval_air = jax.random.normal(k_pa, (B, N, 3), jnp.float32)
    ray = jax.random.normal(k_ray, (B, N, 3), jnp.float32)
    slots = jax.random.normal(k_slots, (B, K_SLOTS, HID), jnp.float32)

    mod = ObjectModuleJAX(k_params)
    mod.init_his(B)

    # step 1: prior is N(0, 1)
    out1 = mod.forward(p_eval_surface, p_eval_air, ray, slots, k_eps1)
    jax.block_until_ready(out1)
    # step 2: exercises the prior-GRU branch (p_what_rnn / p_z_what_net)
    out2 = mod.forward(p_eval_surface, p_eval_air, ray, slots, k_eps2)
    jax.block_until_ready(out2)

    assert out1["rgb"].shape == (B, K_SLOTS, N, 3)
    assert out1["logits_surface"].shape == (B, K_SLOTS, N, 1)
    assert out1["logits_air"].shape == (B, K_SLOTS, N, 1)
    assert out1["z_what"].shape == (B, K_SLOTS, HID)
    assert out1["kl_what"].shape == (B,)
    assert out2["rgb"].shape == (B, K_SLOTS, N, 3)
    print("KERNEL_OK")
</pallas_src>

<mosaic_0001>
module attributes {stable_mosaic.version = 11 : i64} {
  func.func @slot_kernel(%arg0: i32, %arg1: memref<8x32xf32, #tpu.memory_space<vmem>>, %arg2: memref<8x32xf32, #tpu.memory_space<vmem>>, %arg3: memref<8x32xf32, #tpu.memory_space<vmem>>, %arg4: memref<32x96xf32, #tpu.memory_space<vmem>>, %arg5: memref<32x96xf32, #tpu.memory_space<vmem>>, %arg6: memref<1x96xf32, #tpu.memory_space<vmem>>, %arg7: memref<1x96xf32, #tpu.memory_space<vmem>>, %arg8: memref<32x32xf32, #tpu.memory_space<vmem>>, %arg9: memref<1x32xf32, #tpu.memory_space<vmem>>, %arg10: memref<32x64xf32, #tpu.memory_space<vmem>>, %arg11: memref<1x64xf32, #tpu.memory_space<vmem>>, %arg12: memref<8x128xf32, #tpu.memory_space<vmem>>) attributes {dimension_semantics = [#tpu.dimension_semantics<arbitrary>], iteration_bounds = array<i64: 1>, scalar_prefetch = 0 : i64, scratch_operands = 0 : i64, tpu.core_type = #tpu.core_type<tc>, window_params = [{pipeline_mode = #tpu.pipeline_mode<synchronous>, transform_indices = @transform_0, window_bounds = array<i64: 8, 32>}, {pipeline_mode = #tpu.pipeline_mode<synchronous>, transform_indices = @transform_1, window_bounds = array<i64: 8, 32>}, {pipeline_mode = #tpu.pipeline_mode<synchronous>, transform_indices = @transform_2, window_bounds = array<i64: 8, 32>}, {pipeline_mode = #tpu.pipeline_mode<synchronous>, transform_indices = @transform_3, window_bounds = array<i64: 32, 96>}, {pipeline_mode = #tpu.pipeline_mode<synchronous>, transform_indices = @transform_4, window_bounds = array<i64: 32, 96>}, {pipeline_mode = #tpu.pipeline_mode<synchronous>, transform_indices = @transform_5, window_bounds = array<i64: 1, 96>}, {pipeline_mode = #tpu.pipeline_mode<synchronous>, transform_indices = @transform_6, window_bounds = array<i64: 1, 96>}, {pipeline_mode = #tpu.pipeline_mode<synchronous>, transform_indices = @transform_7, window_bounds = array<i64: 32, 32>}, {pipeline_mode = #tpu.pipeline_mode<synchronous>, transform_indices = @transform_8, window_bounds = array<i64: 1, 32>}, {pipeline_mode = #tpu.pipeline_mode<synchronous>, transform_indices = @transform_9, window_bounds = array<i64: 32, 64>}, {pipeline_mode = #tpu.pipeline_mode<synchronous>, transform_indices = @transform_10, window_bounds = array<i64: 1, 64>}, {pipeline_mode = #tpu.pipeline_mode<synchronous>, transform_indices = @transform_11, window_bounds = array<i64: 8, 128>}]} {
    %c0 = arith.constant 0 : index
    %c0_0 = arith.constant 0 : index
    %0 = vector.load %arg1[%c0, %c0_0] : memref<8x32xf32, #tpu.memory_space<vmem>>, vector<8x32xf32>
    %c0_1 = arith.constant 0 : index
    %c0_2 = arith.constant 0 : index
    %1 = vector.load %arg2[%c0_1, %c0_2] : memref<8x32xf32, #tpu.memory_space<vmem>>, vector<8x32xf32>
    %c0_3 = arith.constant 0 : index
    %c0_4 = arith.constant 0 : index
    %2 = vector.load %arg4[%c0_3, %c0_4] : memref<32x96xf32, #tpu.memory_space<vmem>>, vector<32x96xf32>
    %cst = arith.constant dense<0.000000e+00> : vector<8x96xf32>
    %3 = tpu.matmul %0, %2, %cst {dimension_numbers = #tpu.dot_dimension_numbers<[1], [0], [0], [1], [0, 0, 1, 1], [], []>} : vector<8x32xf32>, vector<32x96xf32>, vector<8x96xf32> -> vector<8x96xf32>
    %c0_5 = arith.constant 0 : index
    %c0_6 = arith.constant 0 : index
    %4 = vector.load %arg6[%c0_5, %c0_6] : memref<1x96xf32, #tpu.memory_space<vmem>>, vector<1x96xf32>
    %5 = vector.broadcast %4 : vector<1x96xf32> to vector<8x96xf32>
    %6 = arith.addf %3, %5 : vector<8x96xf32>
    %c0_7 = arith.constant 0 : index
    %c0_8 = arith.constant 0 : index
    %7 = vector.load %arg5[%c0_7, %c0_8] : memref<32x96xf32, #tpu.memory_space<vmem>>, vector<32x96xf32>
    %cst_9 = arith.constant dense<0.000000e+00> : vector<8x96xf32>
    %8 = tpu.matmul %1, %7, %cst_9 {dimension_numbers = #tpu.dot_dimension_numbers<[1], [0], [0], [1], [0, 0, 1, 1], [], []>} : vector<8x32xf32>, vector<32x96xf32>, vector<8x96xf32> -> vector<8x96xf32>
    %c0_10 = arith.constant 0 : index
    %c0_11 = arith.constant 0 : index
    %9 = vector.load %arg7[%c0_10, %c0_11] : memref<1x96xf32, #tpu.memory_space<vmem>>, vector<1x96xf32>
    %10 = vector.broadcast %9 : vector<1x96xf32> to vector<8x96xf32>
    %11 = arith.addf %8, %10 : vector<8x96xf32>
    %12 = vector.extract_strided_slice %6 {offsets = [0, 0], sizes = [8, 64], strides = [1, 1]} : vector<8x96xf32> to vector<8x64xf32>
    %13 = vector.extract_strided_slice %11 {offsets = [0, 0], sizes = [8, 64], strides = [1, 1]} : vector<8x96xf32> to vector<8x64xf32>
    %14 = arith.addf %12, %13 : vector<8x64xf32>
    %cst_12 = arith.constant 0.000000e+00 : f32
    %15 = vector.broadcast %cst_12 : f32 to vector<8x64xf32>
    %16 = arith.subf %15, %14 : vector<8x64xf32>
    %17 = math.exp %16 : vector<8x64xf32>
    %cst_13 = arith.constant 1.000000e+00 : f32
    %18 = vector.broadcast %cst_13 : f32 to vector<8x64xf32>
    %19 = arith.addf %18, %17 : vector<8x64xf32>
    %cst_14 = arith.constant 1.000000e+00 : f32
    %20 = vector.broadcast %cst_14 : f32 to vector<8x64xf32>
    %21 = arith.divf %20, %19 : vector<8x64xf32>
    %22 = vector.extract_strided_slice %21 {offsets = [0, 0], sizes = [8, 32], strides = [1, 1]} : vector<8x64xf32> to vector<8x32xf32>
    %23 = vector.extract_strided_slice %21 {offsets = [0, 32], sizes = [8, 32], strides = [1, 1]} : vector<8x64xf32> to vector<8x32xf32>
    %24 = vector.extract_strided_slice %6 {offsets = [0, 64], sizes = [8, 32], strides = [1, 1]} : vector<8x96xf32> to vector<8x32xf32>
    %25 = vector.extract_strided_slice %11 {offsets = [0, 64], sizes = [8, 32], strides = [1, 1]} : vector<8x96xf32> to vector<8x32xf32>
    %26 = arith.mulf %22, %25 : vector<8x32xf32>
    %27 = arith.addf %24, %26 : vector<8x32xf32>
    %28 = math.tanh %27 : vector<8x32xf32>
    %cst_15 = arith.constant 1.000000e+00 : f32
    %29 = vector.broadcast %cst_15 : f32 to vector<8x32xf32>
    %30 = arith.subf %29, %23 : vector<8x32xf32>
    %31 = arith.mulf %30, %28 : vector<8x32xf32>
    %32 = arith.mulf %23, %1 : vector<8x32xf32>
    %33 = arith.addf %31, %32 : vector<8x32xf32>
    %c0_16 = arith.constant 0 : index
    %c0_17 = arith.constant 0 : index
    %34 = vector.load %arg8[%c0_16, %c0_17] : memref<32x32xf32, #tpu.memory_space<vmem>>, vector<32x32xf32>
    %cst_18 = arith.constant dense<0.000000e+00> : vector<8x32xf32>
    %35 = tpu.matmul %33, %34, %cst_18 {dimension_numbers = #tpu.dot_dimension_numbers<[1], [0], [0], [1], [0, 0, 1, 1], [], []>} : vector<8x32xf32>, vector<32x32xf32>, vector<8x32xf32> -> vector<8x32xf32>
    %c0_19 = arith.constant 0 : index
    %c0_20 = arith.constant 0 : index
    %36 = vector.load %arg9[%c0_19, %c0_20] : memref<1x32xf32, #tpu.memory_space<vmem>>, vector<1x32xf32>
    %37 = vector.broadcast %36 : vector<1x32xf32> to vector<8x32xf32>
    %38 = arith.addf %35, %37 : vector<8x32xf32>
    %cst_21 = arith.constant 0.000000e+00 : f32
    %39 = vector.broadcast %cst_21 : f32 to vector<8x32xf32>
    %40 = arith.maximumf %38, %39 : vector<8x32xf32>
    %c0_22 = arith.constant 0 : index
    %c0_23 = arith.constant 0 : index
    %41 = vector.load %arg10[%c0_22, %c0_23] : memref<32x64xf32, #tpu.memory_space<vmem>>, vector<32x64xf32>
    %cst_24 = arith.constant dense<0.000000e+00> : vector<8x64xf32>
    %42 = tpu.matmul %40, %41, %cst_24 {dimension_numbers = #tpu.dot_dimension_numbers<[1], [0], [0], [1], [0, 0, 1, 1], [], []>} : vector<8x32xf32>, vector<32x64xf32>, vector<8x64xf32> -> vector<8x64xf32>
    %c0_25 = arith.constant 0 : index
    %c0_26 = arith.constant 0 : index
    %43 = vector.load %arg11[%c0_25, %c0_26] : memref<1x64xf32, #tpu.memory_space<vmem>>, vector<1x64xf32>
    %44 = vector.broadcast %43 : vector<1x64xf32> to vector<8x64xf32>
    %45 = arith.addf %42, %44 : vector<8x64xf32>
    %46 = vector.extract_strided_slice %45 {offsets = [0, 0], sizes = [8, 32], strides = [1, 1]} : vector<8x64xf32> to vector<8x32xf32>
    %47 = vector.extract_strided_slice %45 {offsets = [0, 32], sizes = [8, 32], strides = [1, 1]} : vector<8x64xf32> to vector<8x32xf32>
    %cst_27 = arith.constant 0.000000e+00 : f32
    %48 = vector.broadcast %cst_27 : f32 to vector<8x32xf32>
    %49 = arith.maximumf %47, %48 : vector<8x32xf32>
    %50 = math.absf %47 : vector<8x32xf32>
    %cst_28 = arith.constant 0.000000e+00 : f32
    %51 = vector.broadcast %cst_28 : f32 to vector<8x32xf32>
    %52 = arith.subf %51, %50 : vector<8x32xf32>
    %53 = math.exp %52 : vector<8x32xf32>
    %cst_29 = arith.constant 1.000000e+00 : f32
    %54 = vector.broadcast %cst_29 : f32 to vector<8x32xf32>
    %55 = arith.addf %54, %53 : vector<8x32xf32>
    %56 = math.log %55 : vector<8x32xf32>
    %57 = arith.addf %49, %56 : vector<8x32xf32>
    %c0_30 = arith.constant 0 : index
    %c0_31 = arith.constant 0 : index
    %58 = vector.load %arg3[%c0_30, %c0_31] : memref<8x32xf32, #tpu.memory_space<vmem>>, vector<8x32xf32>
    %59 = arith.mulf %57, %58 : vector<8x32xf32>
    %60 = arith.addf %46, %59 : vector<8x32xf32>
    %cst_32 = arith.constant 0.000000e+00 : f32
    %61 = vector.broadcast %cst_32 : f32 to vector<8x32xf32>
    %62 = math.log %57 : vector<8x32xf32>
    %cst_33 = arith.constant 0.000000e+00 : f32
    %63 = vector.broadcast %cst_33 : f32 to vector<8x32xf32>
    %64 = arith.subf %63, %62 : vector<8x32xf32>
    %65 = arith.mulf %57, %57 : vector<8x32xf32>
    %66 = arith.mulf %46, %46 : vector<8x32xf32>
    %67 = arith.addf %65, %66 : vector<8x32xf32>
    %cst_34 = arith.constant 5.000000e-01 : f32
    %68 = vector.broadcast %cst_34 : f32 to vector<8x32xf32>
    %69 = arith.mulf %68, %67 : vector<8x32xf32>
    %70 = arith.addf %64, %69 : vector<8x32xf32>
    %cst_35 = arith.constant 5.000000e-01 : f32
    %71 = vector.broadcast %cst_35 : f32 to vector<8x32xf32>
    %72 = arith.subf %70, %71 : vector<8x32xf32>
    %cst_36 = arith.constant dense<0.000000e+00> : vector<8xf32>
    %73 = vector.multi_reduction <add>, %72, %cst_36 [1] : vector<8x32xf32> to vector<8xf32>
    %74 = vector.shape_cast %73 : vector<8xf32> to vector<8x1xf32>
    %75 = vector.shape_cast %74 : vector<8x1xf32> to vector<8x1xf32>
    %76 = vector.broadcast %75 : vector<8x1xf32> to vector<8x32xf32>
    %77 = tpu.concatenate %33, %61, %60, %76 in 1 : vector<8x32xf32>, vector<8x32xf32>, vector<8x32xf32>, vector<8x32xf32> -> vector<8x128xf32>
    %c0_37 = arith.constant 0 : index
    %c0_38 = arith.constant 0 : index
    %78 = vector.load %arg12[%c0_37, %c0_38] : memref<8x128xf32, #tpu.memory_space<vmem>>, vector<8x128xf32>
    tpu.vector_store %arg12[%c0_37, %c0_38], %77 {strides = array<i32>} : memref<8x128xf32, #tpu.memory_space<vmem>>, vector<8x128xf32>,
    return
  }
  func.func @transform_0(%arg0: i32) -> (i32, i32) {
    %c0_i32 = arith.constant 0 : i32
    %c0_i32_0 = arith.constant 0 : i32
    %c0_i32_1 = arith.constant 0 : i32
    return %c0_i32, %c0_i32_0 : i32, i32
  }
  func.func @transform_1(%arg0: i32) -> (i32, i32) {
    %c0_i32 = arith.constant 0 : i32
    %c0_i32_0 = arith.constant 0 : i32
    %c0_i32_1 = arith.constant 0 : i32
    return %c0_i32, %c0_i32_0 : i32, i32
  }
  func.func @transform_2(%arg0: i32) -> (i32, i32) {
    %c0_i32 = arith.constant 0 : i32
    %c0_i32_0 = arith.constant 0 : i32
    %c0_i32_1 = arith.constant 0 : i32
    return %c0_i32, %c0_i32_0 : i32, i32
  }
  func.func @transform_3(%arg0: i32) -> (i32, i32) {
    %c0_i32 = arith.constant 0 : i32
    %c0_i32_0 = arith.constant 0 : i32
    %c0_i32_1 = arith.constant 0 : i32
    return %c0_i32, %c0_i32_0 : i32, i32
  }
  func.func @transform_4(%arg0: i32) -> (i32, i32) {
    %c0_i32 = arith.constant 0 : i32
    %c0_i32_0 = arith.constant 0 : i32
    %c0_i32_1 = arith.constant 0 : i32
    return %c0_i32, %c0_i32_0 : i32, i32
  }
  func.func @transform_5(%arg0: i32) -> (i32, i32) {
    %c0_i32 = arith.constant 0 : i32
    %c0_i32_0 = arith.constant 0 : i32
    %c0_i32_1 = arith.constant 0 : i32
    return %c0_i32, %c0_i32_0 : i32, i32
  }
  func.func @transform_6(%arg0: i32) -> (i32, i32) {
    %c0_i32 = arith.constant 0 : i32
    %c0_i32_0 = arith.constant 0 : i32
    %c0_i32_1 = arith.constant 0 : i32
    return %c0_i32, %c0_i32_0 : i32, i32
  }
  func.func @transform_7(%arg0: i32) -> (i32, i32) {
    %c0_i32 = arith.constant 0 : i32
    %c0_i32_0 = arith.constant 0 : i32
    %c0_i32_1 = arith.constant 0 : i32
    return %c0_i32, %c0_i32_0 : i32, i32
  }
  func.func @transform_8(%arg0: i32) -> (i32, i32) {
    %c0_i32 = arith.constant 0 : i32
    %c0_i32_0 = arith.constant 0 : i32
    %c0_i32_1 = arith.constant 0 : i32
    return %c0_i32, %c0_i32_0 : i32, i32
  }
  func.func @transform_9(%arg0: i32) -> (i32, i32) {
    %c0_i32 = arith.constant 0 : i32
    %c0_i32_0 = arith.constant 0 : i32
    %c0_i32_1 = arith.constant 0 : i32
    return %c0_i32, %c0_i32_0 : i32, i32
  }
  func.func @transform_10(%arg0: i32) -> (i32, i32) {
    %c0_i32 = arith.constant 0 : i32
    %c0_i32_0 = arith.constant 0 : i32
    %c0_i32_1 = arith.constant 0 : i32
    return %c0_i32, %c0_i32_0 : i32, i32
  }
  func.func @transform_11(%arg0: i32) -> (i32, i32) {
    %c0_i32 = arith.constant 0 : i32
    %c0_i32_0 = arith.constant 0 : i32
    %c0_i32_1 = arith.constant 0 : i32
    return %c0_i32, %c0_i32_0 : i32, i32
  }
}

</mosaic_0001>

<llo_original>
// kernel: slot_update.1
$region0: #{slot_update.1}
  #allocation0 [shape = 'u32[]', space=smem, size = 0x4, offset = 0x4, fixed_abs, tag = 'smem constant byte address 0x4 - core index']
  #allocation1 [shape = 'u32[144,128]{1,0:T(1,128)}', space=vmem, size = 0x12000, scoped, tag = 'internal scratch']
  %s0 = inlined_call_operand.hbm [shape: f32[8,32], index: 0, kind: input, shape index: {}]
  %s1 = inlined_call_operand.vmem [shape: f32[8,32], index: 1, kind: input, shape index: {}]
  %s2 = inlined_call_operand.vmem [shape: f32[8,32], index: 2, kind: input, shape index: {}]
  %s3 = inlined_call_operand.hbm [shape: f32[32,96], index: 3, kind: input, shape index: {}]
  %s4 = inlined_call_operand.hbm [shape: f32[32,96], index: 4, kind: input, shape index: {}]
  %s5 = inlined_call_operand.hbm [shape: f32[1,96], index: 5, kind: input, shape index: {}]
  %s6 = inlined_call_operand.hbm [shape: f32[1,96], index: 6, kind: input, shape index: {}]
  %s7 = inlined_call_operand.hbm [shape: f32[32,32], index: 7, kind: input, shape index: {}]
  %s8 = inlined_call_operand.hbm [shape: f32[1,32], index: 8, kind: input, shape index: {}]
  %s9 = inlined_call_operand.hbm [shape: f32[32,64], index: 9, kind: input, shape index: {}]
  %s10 = inlined_call_operand.hbm [shape: f32[1,64], index: 10, kind: input, shape index: {}]
  %s11 = inlined_call_operand.vmem [shape: f32[8,128], index: 11, kind: output, shape index: {}]
  %s12 = sld [smem:[#allocation0]]
  $region90: #{slot_update.1} parent=0
    _
  %s14 = ssub.s32 1, %s12
  %s15 = scalar_select 0, %s14, %s12
  $region1: #{slot_update.1} parent=0
    #allocation2 [shape = 'u8[4096]{0}', space=vmem, size = 0x1000, scoped, tag = 'input window, operand 0, single buffered']
    #allocation3 [shape = 's32[1]{0}', space=sflag, size = 0x4, scoped, tag = 'scoped memory for slot_update.1']
    #allocation4 [shape = 'u8[16384]{0}', space=vmem, size = 0x4000, scoped, tag = 'input window, operand 3, single buffered']
    #allocation5 [shape = 's32[1]{0}', space=sflag, size = 0x4, scoped, tag = 'scoped memory for slot_update.1']
    #allocation6 [shape = 'u8[16384]{0}', space=vmem, size = 0x4000, scoped, tag = 'input window, operand 4, single buffered']
    #allocation7 [shape = 'u8[512]{0}', space=vmem, size = 0x400, scoped, tag = 'input window, operand 5, single buffered']
    #allocation8 [shape = 's32[1]{0}', space=sflag, size = 0x4, scoped, tag = 'scoped memory for slot_update.1']
    #allocation9 [shape = 'u8[512]{0}', space=vmem, size = 0x400, scoped, tag = 'input window, operand 6, single buffered']
    #allocation10 [shape = 'u8[16384]{0}', space=vmem, size = 0x4000, scoped, tag = 'input window, operand 7, single buffered']
    #allocation11 [shape = 's32[1]{0}', space=sflag, size = 0x4, scoped, tag = 'scoped memory for slot_update.1']
    #allocation12 [shape = 'u8[512]{0}', space=vmem, size = 0x400, scoped, tag = 'input window, operand 8, single buffered']
    #allocation13 [shape = 'u8[16384]{0}', space=vmem, size = 0x4000, scoped, tag = 'input window, operand 9, single buffered']
    #allocation14 [shape = 's32[1]{0}', space=sflag, size = 0x4, scoped, tag = 'scoped memory for slot_update.1']
    #allocation15 [shape = 'u8[512]{0}', space=vmem, size = 0x400, scoped, tag = 'input window, operand 10, single buffered']
    %16 = vsyncpa [#allocation3], 0
    %17 = vsyncpa [#allocation5], 0
    %18 = vsyncpa [#allocation8], 0
    %19 = vsyncpa [#allocation11], 0
    %20 = vsyncpa [#allocation14], 0
    // Predicated region
    $region2: #{slot_update.1} parent=1 // pred_check
      _
    $region3: #{slot_update.1} parent=1 // pred_check_branch
      %22 = sbr.rel (0) target = $region5
    $region4: #{slot_update.1} parent=1 // pred_region
      %s24 = ssub.s32 128, 128
      %25 = vsyncadd [#allocation3], %s24
      %s27 = sshll.u32 [#allocation2], 4
      %s28 = int_to_ptr.vmem [resolvable:$true] %s27
      %30 = dma.hbm_to_vmem [thread:$0]  %s0, 128, %s28, [#allocation3]
    $region5: #{slot_update.1} parent=1 // pred_fallthru
      _
    // Predicated region
    $region6: #{slot_update.1} parent=1 // pred_check
      _
    $region7: #{slot_update.1} parent=1 // pred_check_branch
      %32 = sbr.rel (0) target = $region9
    $region8: #{slot_update.1} parent=1 // pred_region
      _
    $region9: #{slot_update.1} parent=1 // pred_fallthru
      _
    // Predicated region
    $region10: #{slot_update.1} parent=1 // pred_check
      _
    $region11: #{slot_update.1} parent=1 // pred_check_branch
      %34 = sbr.rel (0) target = $region13
    $region12: #{slot_update.1} parent=1 // pred_region
      _
    $region13: #{slot_update.1} parent=1 // pred_fallthru
      _
    // Predicated region
    $region14: #{slot_update.1} parent=1 // pred_check
      _
    $region15: #{slot_update.1} parent=1 // pred_check_branch
      %36 = sbr.rel (0) target = $region17
    $region16: #{slot_update.1} parent=1 // pred_region
      %s38 = ssub.s32 512, 512
      %39 = vsyncadd [#allocation5], %s38
      %s40 = sshll.u32 [#allocation4], 4
      %s41 = int_to_ptr.vmem [resolvable:$true] %s40
      %46 = dma.hbm_to_vmem [thread:$0]  %s3, 512, %s41, [#allocation5], 128, 128, 8
    $region17: #{slot_update.1} parent=1 // pred_fallthru
      _
    // Predicated region
    $region18: #{slot_update.1} parent=1 // pred_check
      _
    $region19: #{slot_update.1} parent=1 // pred_check_branch
      %48 = sbr.rel (0) target = $region21
    $region20: #{slot_update.1} parent=1 // pred_region
      %s50 = ssub.s32 512, 512
      %51 = vsyncadd [#allocation5], %s50
      %s52 = sshll.u32 [#allocation6], 4
      %s53 = int_to_ptr.vmem [resolvable:$true] %s52
      %58 = dma.hbm_to_vmem [thread:$0]  %s4, 512, %s53, [#allocation5], 128, 128, 8
    $region21: #{slot_update.1} parent=1 // pred_fallthru
      _
    // Predicated region
    $region22: #{slot_update.1} parent=1 // pred_check
      _
    $region23: #{slot_update.1} parent=1 // pred_check_branch
      %60 = sbr.rel (0) target = $region25
    $region24: #{slot_update.1} parent=1 // pred_region
      %s62 = ssub.s32 16, 16
      %63 = vsyncadd [#allocation8], %s62
      %s65 = sshll.u32 [#allocation7], 4
      %s66 = int_to_ptr.vmem [resolvable:$true] %s65
      %68 = dma.hbm_to_vmem [thread:$0]  %s5, 16, %s66, [#allocation8]
    $region25: #{slot_update.1} parent=1 // pred_fallthru
      _
    // Predicated region
    $region26: #{slot_update.1} parent=1 // pred_check
      _
    $region27: #{slot_update.1} parent=1 // pred_check_branch
      %70 = sbr.rel (0) target = $region29
    $region28: #{slot_update.1} parent=1 // pred_region
      %s72 = ssub.s32 16, 16
      %73 = vsyncadd [#allocation8], %s72
      %s75 = sshll.u32 [#allocation9], 4
      %s76 = int_to_ptr.vmem [resolvable:$true] %s75
      %78 = dma.hbm_to_vmem [thread:$0]  %s6, 16, %s76, [#allocation8]
    $region29: #{slot_update.1} parent=1 // pred_fallthru
      _
    // Predicated region
    $region30: #{slot_update.1} parent=1 // pred_check
      _
    $region31: #{slot_update.1} parent=1 // pred_check_branch
      %80 = sbr.rel (0) target = $region33
    $region32: #{slot_update.1} parent=1 // pred_region
      %s82 = ssub.s32 512, 512
      %83 = vsyncadd [#allocation11], %s82
      %s84 = sshll.u32 [#allocation10], 4
      %s85 = int_to_ptr.vmem [resolvable:$true] %s84
      %90 = dma.hbm_to_vmem [thread:$0]  %s7, 512, %s85, [#allocation11], 128, 128, 8
    $region33: #{slot_update.1} parent=1 // pred_fallthru
      _
    // Predicated region
    $region34: #{slot_update.1} parent=1 // pred_check
      _
    $region35: #{slot_update.1} parent=1 // pred_check_branch
      %92 = sbr.rel (0) target = $region37
    $region36: #{slot_update.1} parent=1 // pred_region
      %s94 = ssub.s32 16, 16
      %95 = vsyncadd [#allocation11], %s94
      %s97 = sshll.u32 [#allocation12], 4
      %s98 = int_to_ptr.vmem [resolvable:$true] %s97
      %100 = dma.hbm_to_vmem [thread:$0]  %s8, 16, %s98, [#allocation11]
    $region37: #{slot_update.1} parent=1 // pred_fallthru
      _
    // Predicated region
    $region38: #{slot_update.1} parent=1 // pred_check
      _
    $region39: #{slot_update.1} parent=1 // pred_check_branch
      %102 = sbr.rel (0) target = $region41
    $region40: #{slot_update.1} parent=1 // pred_region
      %s104 = ssub.s32 512, 512
      %105 = vsyncadd [#allocation14], %s104
      %s106 = sshll.u32 [#allocation13], 4
      %s107 = int_to_ptr.vmem [resolvable:$true] %s106
      %112 = dma.hbm_to_vmem [thread:$0]  %s9, 512, %s107, [#allocation14], 128, 128, 8
    $region41: #{slot_update.1} parent=1 // pred_fallthru
      _
    // Predicated region
    $region42: #{slot_update.1} parent=1 // pred_check
      _
    $region43: #{slot_update.1} parent=1 // pred_check_branch
      %114 = sbr.rel (0) target = $region45
    $region44: #{slot_update.1} parent=1 // pred_region
      %s116 = ssub.s32 16, 16
      %117 = vsyncadd [#allocation14], %s116
      %s119 = sshll.u32 [#allocation15], 4
      %s120 = int_to_ptr.vmem [resolvable:$true] %s119
      %122 = dma.hbm_to_vmem [thread:$0]  %s10, 16, %s120, [#allocation14]
    $region45: #{slot_update.1} parent=1 // pred_fallthru
      _
    // Predicated region
    $region46: #{slot_update.1} parent=1 // pred_check
      _
    $region47: #{slot_update.1} parent=1 // pred_check_branch
      %124 = sbr.rel (0) target = $region49
    $region48: #{slot_update.1} parent=1 // pred_region
      %125 = dma.done [#allocation3], 128
    $region49: #{slot_update.1} parent=1 // pred_fallthru
      _
    // Predicated region
    $region50: #{slot_update.1} parent=1 // pred_check
      _
    $region51: #{slot_update.1} parent=1 // pred_check_branch
      %127 = sbr.rel (0) target = $region53
    $region52: #{slot_update.1} parent=1 // pred_region
      %128 = dma.done [#allocation5], 512
    $region53: #{slot_update.1} parent=1 // pred_fallthru
      _
    // Predicated region
    $region54: #{slot_update.1} parent=1 // pred_check
      _
    $region55: #{slot_update.1} parent=1 // pred_check_branch
      %130 = sbr.rel (0) target = $region57
    $region56: #{slot_update.1} parent=1 // pred_region
      %131 = dma.done [#allocation5], 512
    $region57: #{slot_update.1} parent=1 // pred_fallthru
      _
    // Predicated region
    $region58: #{slot_update.1} parent=1 // pred_check
      _
    $region59: #{slot_update.1} parent=1 // pred_check_branch
      %133 = sbr.rel (0) target = $region61
    $region60: #{slot_update.1} parent=1 // pred_region
      %134 = dma.done [#allocation8], 16
    $region61: #{slot_update.1} parent=1 // pred_fallthru
      _
    // Predicated region
    $region62: #{slot_update.1} parent=1 // pred_check
      _
    $region63: #{slot_update.1} parent=1 // pred_check_branch
      %136 = sbr.rel (0) target = $region65
    $region64: #{slot_update.1} parent=1 // pred_region
      %137 = dma.done [#allocation8], 16
    $region65: #{slot_update.1} parent=1 // pred_fallthru
      _
    // Predicated region
    $region66: #{slot_update.1} parent=1 // pred_check
      _
    $region67: #{slot_update.1} parent=1 // pred_check_branch
      %139 = sbr.rel (0) target = $region69
    $region68: #{slot_update.1} parent=1 // pred_region
      %140 = dma.done [#allocation11], 512
    $region69: #{slot_update.1} parent=1 // pred_fallthru
      _
    // Predicated region
    $region70: #{slot_update.1} parent=1 // pred_check
      _
    $region71: #{slot_update.1} parent=1 // pred_check_branch
      %142 = sbr.rel (0) target = $region73
    $region72: #{slot_update.1} parent=1 // pred_region
      %143 = dma.done [#allocation11], 16
    $region73: #{slot_update.1} parent=1 // pred_fallthru
      _
    // Predicated region
    $region74: #{slot_update.1} parent=1 // pred_check
      _
    $region75: #{slot_update.1} parent=1 // pred_check_branch
      %145 = sbr.rel (0) target = $region77
    $region76: #{slot_update.1} parent=1 // pred_region
      %146 = dma.done [#allocation14], 512
    $region77: #{slot_update.1} parent=1 // pred_fallthru
      _
    // Predicated region
    $region78: #{slot_update.1} parent=1 // pred_check
      _
    $region79: #{slot_update.1} parent=1 // pred_check_branch
      %148 = sbr.rel (0) target = $region81
    $region80: #{slot_update.1} parent=1 // pred_region
      %149 = dma.done [#allocation14], 16
    $region81: #{slot_update.1} parent=1 // pred_fallthru
      _
    %v150 = vld [vmem:[#allocation2] sm:$0xff]
    %v151 = vld [vmem:[%s1] sm:$0xff]
    %v152 = vld [vmem:[#allocation4] sm:$0xff]
    %v153 = vld [vmem:[#allocation4 + $0x8] sm:$0xff]
    %v154 = vld [vmem:[#allocation4 + $0x10] sm:$0xff]
    %v155 = vld [vmem:[#allocation4 + $0x18] sm:$0xff]
    %v156 = vld [vmem:[#allocation7] sm:$0x1]
    %v158 = vlaneseq
    %v159 = vshrl.u32 %v158, 7
    %v160 = vsub.s32 0, %v159
    %v161 = vrot.slane %v156, %v160
    %vm163 = vcmask 261120
    %v165 = vsel %vm163, %v150, 0
    %167 = vmatprep.subr.mxu0 0.0
    %168 = vmatpush1.msra.mxu0 0.0
    %169 = vmatprep.subr.mxu0 0.0
    %170 = vmatpush1.msra.mxu0 0.0
    %171 = vmatprep.subr.mxu0 0.0
    %172 = vmatpush1.msra.mxu0 0.0
    %173 = vmatprep.subr.mxu0 0.0
    %174 = vmatpush1.msra.mxu0 0.0
    %175 = vmatprep.subr.mxu0 0.0
    %176 = vmatpush1.msra.mxu0 0.0
    %177 = vmatprep.subr.mxu0 0.0
    %178 = vmatpush1.msra.mxu0 0.0
    %179 = vmatprep.subr.mxu0 0.0
    %180 = vmatpush1.msra.mxu0 0.0
    %181 = vmatprep.subr.mxu0 0.0
    %182 = vmatpush1.msra.mxu0 0.0
    %183 = vmatprep.subr.mxu0 0.0
    %184 = vmatpush1.msra.mxu0 0.0
    %185 = vmatprep.subr.mxu0 0.0
    %186 = vmatpush1.msra.mxu0 0.0
    %187 = vmatprep.subr.mxu0 0.0
    %188 = vmatpush1.msra.mxu0 0.0
    %189 = vmatprep.subr.mxu0 0.0
    %190 = vmatpush1.msra.mxu0 0.0
    %191 = vmatprep.subr.mxu0 0.0
    %192 = vmatpush1.msra.mxu0 %v155
    %193 = vmatprep.subr.mxu0 0.0
    %194 = vmatpush1.msra.mxu0 %v154
    %195 = vmatprep.subr.mxu0 0.0
    %196 = vmatpush1.msra.mxu0 %v153
    %197 = vmatprep.subr.mxu0 0.0
    %198 = vmatpush1.msra.mxu0 %v152
    %199 = vmatprep.subr.mxu0 0.0
    %200 = vmatpush2.msra.mxu0 0.0
    %201 = vmatprep.subr.mxu0 0.0
    %202 = vmatpush2.msra.mxu0 0.0
    %203 = vmatprep.subr.mxu0 0.0
    %204 = vmatpush2.msra.mxu0 0.0
    %205 = vmatprep.subr.mxu0 0.0
    %206 = vmatpush2.msra.mxu0 0.0
    %207 = vmatprep.subr.mxu0 0.0
    %208 = vmatpush2.msra.mxu0 0.0
    %209 = vmatprep.subr.mxu0 0.0
    %210 = vmatpush2.msra.mxu0 0.0
    %211 = vmatprep.subr.mxu0 0.0
    %212 = vmatpush2.msra.mxu0 0.0
    %213 = vmatprep.subr.mxu0 0.0
    %214 = vmatpush2.msra.mxu0 0.0
    %215 = vmatprep.subr.mxu0 0.0
    %216 = vmatpush2.msra.mxu0 0.0
    %217 = vmatprep.subr.mxu0 0.0
    %218 = vmatpush2.msra.mxu0 0.0
    %219 = vmatprep.subr.mxu0 0.0
    %220 = vmatpush2.msra.mxu0 0.0
    %221 = vmatprep.subr.mxu0 0.0
    %222 = vmatpush2.msra.mxu0 0.0
    %223 = vmatprep.subr.mxu0 0.0
    %224 = vmatpush2.msra.mxu0 0.0
    %225 = vmatprep.subr.mxu0 0.0
    %226 = vmatpush2.msra.mxu0 0.0
    %227 = vmatprep.subr.mxu0 0.0
    %228 = vmatpush2.msra.mxu0 0.0
    %229 = vmatprep.subr.mxu0 0.0
    %230 = vmatpush2.msra.mxu0 0.0
    %231 = vmatprep.mubr.f32.mxu0 0.0
    %232 = vmatmul.mubr.f32.gmra.mxu0 %v165
    %v233 = vpop.f32.mrf.mxu0
    %v234 = vadd.f32 %v161, %v233
    %v235 = vpop.f32.mrf.mxu0
    %236 = vdwg.mxu0
    %v237 = vld [vmem:[#allocation6] sm:$0xff]
    %v238 = vld [vmem:[#allocation6 + $0x8] sm:$0xff]
    %v239 = vld [vmem:[#allocation6 + $0x10] sm:$0xff]
    %v240 = vld [vmem:[#allocation6 + $0x18] sm:$0xff]
    %v241 = vld [vmem:[#allocation9] sm:$0x1]
    %v243 = vlaneseq
    %v244 = vshrl.u32 %v243, 7
    %v245 = vsub.s32 0, %v244
    %v246 = vrot.slane %v241, %v245
    %v249 = vsel %vm163, %v151, 0
    %251 = vmatprep.subr.mxu0 0.0
    %252 = vmatpush1.msra.mxu0 0.0
    %253 = vmatprep.subr.mxu0 0.0
    %254 = vmatpush1.msra.mxu0 0.0
    %255 = vmatprep.subr.mxu0 0.0
    %256 = vmatpush1.msra.mxu0 0.0
    %257 = vmatprep.subr.mxu0 0.0
    %258 = vmatpush1.msra.mxu0 0.0
    %259 = vmatprep.subr.mxu0 0.0
    %260 = vmatpush1.msra.mxu0 0.0
    %261 = vmatprep.subr.mxu0 0.0
    %262 = vmatpush1.msra.mxu0 0.0
    %263 = vmatprep.subr.mxu0 0.0
    %264 = vmatpush1.msra.mxu0 0.0
    %265 = vmatprep.subr.mxu0 0.0
    %266 = vmatpush1.msra.mxu0 0.0
    %267 = vmatprep.subr.mxu0 0.0
    %268 = vmatpush1.msra.mxu0 0.0
    %269 = vmatprep.subr.mxu0 0.0
    %270 = vmatpush1.msra.mxu0 0.0
    %271 = vmatprep.subr.mxu0 0.0
    %272 = vmatpush1.msra.mxu0 0.0
    %273 = vmatprep.subr.mxu0 0.0
    %274 = vmatpush1.msra.mxu0 0.0
    %275 = vmatprep.subr.mxu0 0.0
    %276 = vmatpush1.msra.mxu0 %v240
    %277 = vmatprep.subr.mxu0 0.0
    %278 = vmatpush1.msra.mxu0 %v239
    %279 = vmatprep.subr.mxu0 0.0
    %280 = vmatpush1.msra.mxu0 %v238
    %281 = vmatprep.subr.mxu0 0.0
    %282 = vmatpush1.msra.mxu0 %v237
    %283 = vmatprep.subr.mxu0 0.0
    %284 = vmatpush2.msra.mxu0 0.0
    %285 = vmatprep.subr.mxu0 0.0
    %286 = vmatpush2.msra.mxu0 0.0
    %287 = vmatprep.subr.mxu0 0.0
    %288 = vmatpush2.msra.mxu0 0.0
    %289 = vmatprep.subr.mxu0 0.0
    %290 = vmatpush2.msra.mxu0 0.0
    %291 = vmatprep.subr.mxu0 0.0
    %292 = vmatpush2.msra.mxu0 0.0
    %293 = vmatprep.subr.mxu0 0.0
    %294 = vmatpush2.msra.mxu0 0.0
    %295 = vmatprep.subr.mxu0 0.0
    %296 = vmatpush2.msra.mxu0 0.0
    %297 = vmatprep.subr.mxu0 0.0
    %298 = vmatpush2.msra.mxu0 0.0
    %299 = vmatprep.subr.mxu0 0.0
    %300 = vmatpush2.msra.mxu0 0.0
    %301 = vmatprep.subr.mxu0 0.0
    %302 = vmatpush2.msra.mxu0 0.0
    %303 = vmatprep.subr.mxu0 0.0
    %304 = vmatpush2.msra.mxu0 0.0
    %305 = vmatprep.subr.mxu0 0.0
    %306 = vmatpush2.msra.mxu0 0.0
    %307 = vmatprep.subr.mxu0 0.0
    %308 = vmatpush2.msra.mxu0 0.0
    %309 = vmatprep.subr.mxu0 0.0
    %310 = vmatpush2.msra.mxu0 0.0
    %311 = vmatprep.subr.mxu0 0.0
    %312 = vmatpush2.msra.mxu0 0.0
    %313 = vmatprep.subr.mxu0 0.0
    %314 = vmatpush2.msra.mxu0 0.0
    %315 = vmatprep.mubr.f32.mxu0 0.0
    %316 = vmatmul.mubr.f32.gmra.mxu0 %v249
    %v317 = vpop.f32.mrf.mxu0
    %v318 = vadd.f32 %v246, %v317
    %v319 = vpop.f32.mrf.mxu0
    %320 = vdwg.mxu0
    %v321 = vadd.f32 %v234, %v318
    %v322 = vsub.f32 0.0, %v321
    %v323 = vmul.f32 %v322, 1.442695
    %v324 = vpow.pop %v323
    %v325 = vadd.f32 %v324, 1.0
    %v326 = vrcp.pop %v325
    %v327 = vmul.f32 1.0, %v326
    %329 = vrot.lane.b32.xlu0 %v318, 64
    %v330 = vpop.permute.xlu0 %329
    %v332 = vmul.f32 %v327, %v330
    %334 = vrot.lane.b32.xlu0 %v332, 64
    %v335 = vpop.permute.xlu0 %334
    %v337 = vadd.f32 %v234, %v335
    %v338 = vtanh.pop %v337
    %v339 = vsub.f32 1.0, %v327
    %341 = vrot.lane.b32.xlu0 %v338, 96
    %v342 = vpop.permute.xlu0 %341
    %v344 = vmul.f32 %v339, %v342
    %345 = vrot.lane.b32.xlu0 %v151, 32
    %v346 = vpop.permute.xlu0 %345
    %v348 = vmul.f32 %v327, %v346
    %v349 = vadd.f32 %v344, %v348
    %v350 = vld [vmem:[#allocation10] sm:$0xff]
    %v351 = vld [vmem:[#allocation10 + $0x8] sm:$0xff]
    %v352 = vld [vmem:[#allocation10 + $0x10] sm:$0xff]
    %v353 = vld [vmem:[#allocation10 + $0x18] sm:$0xff]
    %v354 = vld [vmem:[#allocation12] sm:$0x1]
    %v356 = vlaneseq
    %v357 = vshrl.u32 %v356, 7
    %v358 = vsub.s32 0, %v357
    %v359 = vrot.slane %v354, %v358
    %362 = vrot.lane.b32.xlu0 %v349, 96
    %v363 = vpop.permute.xlu0 %362
    %v364 = vsel %vm163, %v363, 0
    %366 = vmatprep.subr.mxu0 0.0
    %367 = vmatpush1.msra.mxu0 0.0
    %368 = vmatprep.subr.mxu0 0.0
    %369 = vmatpush1.msra.mxu0 0.0
    %370 = vmatprep.subr.mxu0 0.0
    %371 = vmatpush1.msra.mxu0 0.0
    %372 = vmatprep.subr.mxu0 0.0
    %373 = vmatpush1.msra.mxu0 0.0
    %374 = vmatprep.subr.mxu0 0.0
    %375 = vmatpush1.msra.mxu0 0.0
    %376 = vmatprep.subr.mxu0 0.0
    %377 = vmatpush1.msra.mxu0 0.0
    %378 = vmatprep.subr.mxu0 0.0
    %379 = vmatpush1.msra.mxu0 0.0
    %380 = vmatprep.subr.mxu0 0.0
    %381 = vmatpush1.msra.mxu0 0.0
    %382 = vmatprep.subr.mxu0 0.0
    %383 = vmatpush1.msra.mxu0 0.0
    %384 = vmatprep.subr.mxu0 0.0
    %385 = vmatpush1.msra.mxu0 0.0
    %386 = vmatprep.subr.mxu0 0.0
    %387 = vmatpush1.msra.mxu0 0.0
    %388 = vmatprep.subr.mxu0 0.0
    %389 = vmatpush1.msra.mxu0 0.0
    %390 = vmatprep.subr.mxu0 0.0
    %391 = vmatpush1.msra.mxu0 %v353
    %392 = vmatprep.subr.mxu0 0.0
    %393 = vmatpush1.msra.mxu0 %v352
    %394 = vmatprep.subr.mxu0 0.0
    %395 = vmatpush1.msra.mxu0 %v351
    %396 = vmatprep.subr.mxu0 0.0
    %397 = vmatpush1.msra.mxu0 %v350
    %398 = vmatprep.subr.mxu0 0.0
    %399 = vmatpush2.msra.mxu0 0.0
    %400 = vmatprep.subr.mxu0 0.0
    %401 = vmatpush2.msra.mxu0 0.0
    %402 = vmatprep.subr.mxu0 0.0
    %403 = vmatpush2.msra.mxu0 0.0
    %404 = vmatprep.subr.mxu0 0.0
    %405 = vmatpush2.msra.mxu0 0.0
    %406 = vmatprep.subr.mxu0 0.0
    %407 = vmatpush2.msra.mxu0 0.0
    %408 = vmatprep.subr.mxu0 0.0
    %409 = vmatpush2.msra.mxu0 0.0
    %410 = vmatprep.subr.mxu0 0.0
    %411 = vmatpush2.msra.mxu0 0.0
    %412 = vmatprep.subr.mxu0 0.0
    %413 = vmatpush2.msra.mxu0 0.0
    %414 = vmatprep.subr.mxu0 0.0
    %415 = vmatpush2.msra.mxu0 0.0
    %416 = vmatprep.subr.mxu0 0.0
    %417 = vmatpush2.msra.mxu0 0.0
    %418 = vmatprep.subr.mxu0 0.0
    %419 = vmatpush2.msra.mxu0 0.0
    %420 = vmatprep.subr.mxu0 0.0
    %421 = vmatpush2.msra.mxu0 0.0
    %422 = vmatprep.subr.mxu0 0.0
    %423 = vmatpush2.msra.mxu0 0.0
    %424 = vmatprep.subr.mxu0 0.0
    %425 = vmatpush2.msra.mxu0 0.0
    %426 = vmatprep.subr.mxu0 0.0
    %427 = vmatpush2.msra.mxu0 0.0
    %428 = vmatprep.subr.mxu0 0.0
    %429 = vmatpush2.msra.mxu0 0.0
    %430 = vmatprep.mubr.f32.mxu0 0.0
    %431 = vmatmul.mubr.f32.gmra.mxu0 %v364
    %v432 = vpop.f32.mrf.mxu0
    %v433 = vadd.f32 %v359, %v432
    %v434 = vpop.f32.mrf.mxu0
    %435 = vdwg.mxu0
    %v436 = vmax.f32 %v433, 0.0
    %v437 = vld [vmem:[#allocation13] sm:$0xff]
    %v438 = vld [vmem:[#allocation13 + $0x8] sm:$0xff]
    %v439 = vld [vmem:[#allocation13 + $0x10] sm:$0xff]
    %v440 = vld [vmem:[#allocation13 + $0x18] sm:$0xff]
    %v441 = vld [vmem:[#allocation15] sm:$0x1]
    %v443 = vlaneseq
    %v444 = vshrl.u32 %v443, 7
    %v445 = vsub.s32 0, %v444
    %v446 = vrot.slane %v441, %v445
    %v449 = vsel %vm163, %v436, 0
    %451 = vmatprep.subr.mxu0 0.0
    %452 = vmatpush1.msra.mxu0 0.0
    %453 = vmatprep.subr.mxu0 0.0
    %454 = vmatpush1.msra.mxu0 0.0
    %455 = vmatprep.subr.mxu0 0.0
    %456 = vmatpush1.msra.mxu0 0.0
    %457 = vmatprep.subr.mxu0 0.0
    %458 = vmatpush1.msra.mxu0 0.0
    %459 = vmatprep.subr.mxu0 0.0
    %460 = vmatpush1.msra.mxu0 0.0
    %461 = vmatprep.subr.mxu0 0.0
    %462 = vmatpush1.msra.mxu0 0.0
    %463 = vmatprep.subr.mxu0 0.0
    %464 = vmatpush1.msra.mxu0 0.0
    %465 = vmatprep.subr.mxu0 0.0
    %466 = vmatpush1.msra.mxu0 0.0
    %467 = vmatprep.subr.mxu0 0.0
    %468 = vmatpush1.msra.mxu0 0.0
    %469 = vmatprep.subr.mxu0 0.0
    %470 = vmatpush1.msra.mxu0 0.0
    %471 = vmatprep.subr.mxu0 0.0
    %472 = vmatpush1.msra.mxu0 0.0
    %473 = vmatprep.subr.mxu0 0.0
    %474 = vmatpush1.msra.mxu0 0.0
    %475 = vmatprep.subr.mxu0 0.0
    %476 = vmatpush1.msra.mxu0 %v440
    %477 = vmatprep.subr.mxu0 0.0
    %478 = vmatpush1.msra.mxu0 %v439
    %479 = vmatprep.subr.mxu0 0.0
    %480 = vmatpush1.msra.mxu0 %v438
    %481 = vmatprep.subr.mxu0 0.0
    %482 = vmatpush1.msra.mxu0 %v437
    %483 = vmatprep.subr.mxu0 0.0
    %484 = vmatpush2.msra.mxu0 0.0
    %485 = vmatprep.subr.mxu0 0.0
    %486 = vmatpush2.msra.mxu0 0.0
    %487 = vmatprep.subr.mxu0 0.0
    %488 = vmatpush2.msra.mxu0 0.0
    %489 = vmatprep.subr.mxu0 0.0
    %490 = vmatpush2.msra.mxu0 0.0
    %491 = vmatprep.subr.mxu0 0.0
    %492 = vmatpush2.msra.mxu0 0.0
    %493 = vmatprep.subr.mxu0 0.0
    %494 = vmatpush2.msra.mxu0 0.0
    %495 = vmatprep.subr.mxu0 0.0
    %496 = vmatpush2.msra.mxu0 0.0
    %497 = vmatprep.subr.mxu0 0.0
    %498 = vmatpush2.msra.mxu0 0.0
    %499 = vmatprep.subr.mxu0 0.0
    %500 = vmatpush2.msra.mxu0 0.0
    %501 = vmatprep.subr.mxu0 0.0
    %502 = vmatpush2.msra.mxu0 0.0
    %503 = vmatprep.subr.mxu0 0.0
    %504 = vmatpush2.msra.mxu0 0.0
    %505 = vmatprep.subr.mxu0 0.0
    %506 = vmatpush2.msra.mxu0 0.0
    %507 = vmatprep.subr.mxu0 0.0
    %508 = vmatpush2.msra.mxu0 0.0
    %509 = vmatprep.subr.mxu0 0.0
    %510 = vmatpush2.msra.mxu0 0.0
    %511 = vmatprep.subr.mxu0 0.0
    %512 = vmatpush2.msra.mxu0 0.0
    %513 = vmatprep.subr.mxu0 0.0
    %514 = vmatpush2.msra.mxu0 0.0
    %515 = vmatprep.mubr.f32.mxu0 0.0
    %516 = vmatmul.mubr.f32.gmra.mxu0 %v449
    %v517 = vpop.f32.mrf.mxu0
    %v518 = vadd.f32 %v446, %v517
    %v519 = vpop.f32.mrf.mxu0
    %520 = vdwg.mxu0
    %v521 = vmax.f32 %v518, 0.0
    %v522 = vand.u32 2147483647, %v518
    %v523 = vsub.f32 0.0, %v522
    %v524 = vmul.f32 %v523, 1.442695
    %v525 = vpow.pop %v524
    %v526 = vadd.f32 %v525, 1.0
    %v527 = vlog2.pop %v526
    %v528 = vmul.f32 %v527, 0.6931472
    %v529 = vadd.f32 %v521, %v528
    %v530 = vld [vmem:[%s2] sm:$0xff]
    %532 = vrot.lane.b32.xlu0 %v530, 32
    %v533 = vpop.permute.xlu0 %532
    %v535 = vmul.f32 %v529, %v533
    %537 = vrot.lane.b32.xlu0 %v535, 96
    %v538 = vpop.permute.xlu0 %537
    %v540 = vadd.f32 %v518, %v538
    %v541 = vlog2.pop %v529
    %v542 = vmul.f32 %v541, 0.6931472
    %v543 = vsub.f32 0.0, %v542
    %v544 = vmul.f32 %v529, %v529
    %v545 = vmul.f32 %v518, %v518
    %547 = vrot.lane.b32.xlu0 %v545, 32
    %v548 = vpop.permute.xlu0 %547
    %v550 = vadd.f32 %v544, %v548
    %v551 = vmul.f32 %v550, 0.5
    %v552 = vadd.f32 %v543, %v551
    %v553 = vsub.f32 %v552, 0.5
    %555 = vrot.lane.b32.xlu0 %v553, 96
    %v556 = vpop.permute.xlu0 %555
    %v558 = vsel %vm163, %v556, 0.0
    %559 = vadd.xlane.f32.xlu0 %v558
    %v560 = vpop.xlane.xlu0 %559
    %563 = vrot.lane.b32.xlu0 %v540, 64
    %v564 = vpop.permute.xlu0 %563
    %v566 = vsel %vm163, %v363, 0.0
    %vm567 = vcmask 523264
    %v568 = vsel %vm567, %v566, %v564
    %vm569 = vcmask 785408
    %v570 = vsel %vm569, %v568, %v560
    %571 = vst [vmem:[%s11] sm:$0xff] %v570
    // Predicated region
    $region82: #{slot_update.1} parent=1 // pred_check
      _
    $region83: #{slot_update.1} parent=1 // pred_check_branch
      %573 = sbr.rel (0) target = $region85
    $region84: #{slot_update.1} parent=1 // pred_region
      _
    $region85: #{slot_update.1} parent=1 // pred_fallthru
      _
    // Predicated region
    $region86: #{slot_update.1} parent=1 // pred_check
      _
    $region87: #{slot_update.1} parent=1 // pred_check_branch
      %575 = sbr.rel (0) target = $region89
    $region88: #{slot_update.1} parent=1 // pred_region
      _
    $region89: #{slot_update.1} parent=1 // pred_fallthru
      _
    %576 = vsyncpa [#allocation3], 1
    %577 = vsyncpa [#allocation5], 1
    %578 = vsyncpa [#allocation8], 1
    %579 = vsyncpa [#allocation11], 1
    %580 = vsyncpa [#allocation14], 1

</llo_original>
